<compile_context>
chip_gen: v7x
topology: tpu7x:2x2x1
jax: 0.10.0
libtpu: 0.0.40
codegen_flags: <defaults>
</compile_context>

<pallas_src>
import functools

import numpy as np
import jax
import jax.numpy as jnp
from jax.experimental import pallas as pl
from jax.experimental.pallas import tpu as pltpu


# ---------------------------------------------------------------------------
# Pallas kernels: tiled (bs, D) @ (D, D) matmul with fused bias add.
# ---------------------------------------------------------------------------
def _mixer_matmul_onepass_kernel(x_ref, m_ref, b_ref, o_ref):
    # Whole contraction fits in one K tile: no accumulator needed.
    acc = jnp.dot(x_ref[...], m_ref[...], preferred_element_type=jnp.float32)
    o_ref[...] = (acc + b_ref[...].astype(jnp.float32)).astype(o_ref.dtype)


def _mixer_matmul_acc_kernel(x_ref, m_ref, b_ref, o_ref, acc_ref):
    # grid = (batch tiles, out-feature tiles, contraction tiles); k is innermost.
    k = pl.program_id(2)

    @pl.when(k == 0)
    def _():
        acc_ref[...] = jnp.zeros_like(acc_ref)

    acc_ref[...] += jnp.dot(x_ref[...], m_ref[...],
                            preferred_element_type=jnp.float32)

    @pl.when(k == pl.num_programs(2) - 1)
    def _():
        # Fused bias add (free VPU filler) + one full-width store of the output tile.
        o_ref[...] = (acc_ref[...] + b_ref[...].astype(jnp.float32)).astype(o_ref.dtype)


def _pick_batch_tile(bs, cap=256):
    """Largest multiple-of-8 divisor of bs (<= cap); prefer >=2 grid steps (megacore)."""
    if bs <= 8:
        return bs
    best = None
    t = 8
    while t <= min(bs, cap):
        if bs % t == 0:
            best = t
        t += 8
    if best is None:
        return bs  # full-extent block is always legal
    if bs // best < 2 and best % 2 == 0 and best // 2 >= 8 and bs % (best // 2) == 0:
        best //= 2  # give the two-TC chips at least 2 parallel batch steps
    return best


def _pick_feature_tile(D, cap=512):
    """Full D when small; otherwise a 128-aligned divisor panel for the MXU."""
    if D <= cap:
        return D
    for t in (512, 384, 256, 128):
        if D % t == 0:
            return t
    return D


def _mixer_matmul(x, m, b, out_dtype):
    bs, D = x.shape
    tm = _pick_batch_tile(bs)
    tn = _pick_feature_tile(D)
    tk = _pick_feature_tile(D)
    nm, nn, nk = bs // tm, D // tn, D // tk

    x_spec3 = pl.BlockSpec((tm, tk), lambda i, j, k: (i, k))   # activation tile
    m_spec3 = pl.BlockSpec((tk, tn), lambda i, j, k: (k, j))   # fused dense weight tile
    b_spec3 = pl.BlockSpec((1, tn), lambda i, j, k: (0, j))    # bias panel
    o_spec3 = pl.BlockSpec((tm, tn), lambda i, j, k: (i, j))

    if nk == 1:
        # Fast path: single contraction tile -> no scratch accumulator, no epilogue.
        grid_spec = pltpu.PrefetchScalarGridSpec(
            num_scalar_prefetch=0,
            grid=(nm, nn),
            in_specs=[
                pl.BlockSpec((tm, tk), lambda i, j: (i, 0)),
                pl.BlockSpec((tk, tn), lambda i, j: (0, j)),
                pl.BlockSpec((1, tn), lambda i, j: (0, j)),
            ],
            out_specs=pl.BlockSpec((tm, tn), lambda i, j: (i, j)),
        )
        kernel = _mixer_matmul_onepass_kernel
        dim_sem = ("parallel", "parallel")
    else:
        grid_spec = pltpu.PrefetchScalarGridSpec(
            num_scalar_prefetch=0,
            grid=(nm, nn, nk),
            in_specs=[x_spec3, m_spec3, b_spec3],
            out_specs=o_spec3,
            scratch_shapes=[pltpu.VMEM((tm, tn), jnp.float32)],
        )
        kernel = _mixer_matmul_acc_kernel
        dim_sem = ("parallel", "parallel", "arbitrary")

    return pl.pallas_call(
        kernel,
        out_shape=jax.ShapeDtypeStruct((bs, D), out_dtype),
        grid_spec=grid_spec,
        compiler_params=pltpu.CompilerParams(dimension_semantics=dim_sem),
    )(x, m, b)


# ---------------------------------------------------------------------------
# Fold the (purely linear) permute -> block-diag -> unpermute stack into one
# dense (D, D) matrix M such that forward(x) == x @ M (+ bias).  Built in f32,
# once, on the XLA side (weights are tiny); row j of the result is forward(e_j).
# ---------------------------------------------------------------------------
def _build_mixer_matrix(weights, block_dim, D):
    B = block_dim
    L = weights.shape[0]
    nb = D // B
    m = jnp.eye(D, dtype=jnp.float32)
    for i in range(L):
        bi = B ** i
        q = D // (B * bi)
        # P_i: view (D, q, B, B^i) -> swap last two axes -> (D, nb, B)
        m = m.reshape(D, q, B, bi).swapaxes(2, 3).reshape(D, nb, B)
        # BlockWeight i (the torch.bmm): out[., n, j] = sum_k in[., n, k] * w[n, k, j]
        m = jnp.einsum("rnk,nkj->rnj", m, weights[i].astype(jnp.float32),
                       preferred_element_type=jnp.float32)
        # P_i^{-1}
        m = m.reshape(D, q, bi, B).swapaxes(2, 3).reshape(D, D)
    return m


def block_linear_mixer_forward(x, weights, block_dim, bias=None, compute_dtype=None):
    """Forward of BlockLinear_MixerBlock.

    x:             (bs, input_dim)
    weights:       (num_layers, input_dim // block_dim, block_dim, block_dim)
    bias:          optional (1, input_dim)
    compute_dtype: optional matmul operand dtype (e.g. jnp.bfloat16 on v6e/v7x —
                   do NOT use int8 on v7x); accumulation is always f32.
    """
    bs, D = x.shape
    B = block_dim
    L = weights.shape[0]
    assert B ** L == D, "input_dim must be an exact power of block_dim"
    # TODO(synk): the PyTorch module also runs when input_dim != block_dim**num_layers,
    # in which case its view(-1, B, B**i) mixes rows across the batch; not supported here.
    # TODO(synk): for very large D (where the dense O(D^2) matmul loses to the O(D*B*L)
    # butterfly), a fully fused in-kernel butterfly path would beat this dense fast path.

    m = _build_mixer_matrix(weights, block_dim, D)
    if bias is None:
        b = jnp.zeros((1, D), jnp.float32)
    else:
        b = jnp.asarray(bias, jnp.float32).reshape(1, D)

    out_dtype = x.dtype
    if compute_dtype is not None:           # bf16 fast path for v6e/v7x (loosen tolerances)
        x = x.astype(compute_dtype)
        m = m.astype(compute_dtype)
    return _mixer_matmul(x, m, b, out_dtype)


# ---------------------------------------------------------------------------
# Pure numpy float64 reference, mirroring the PyTorch forward exactly.
# ---------------------------------------------------------------------------
def _reference_forward_np(x, weights, block_dim, bias=None):
    x = np.asarray(x, dtype=np.float64)
    w = np.asarray(weights, dtype=np.float64)
    bs, D = x.shape
    B = block_dim
    nb = D // B
    y = x
    for i in range(w.shape[0]):
        bi = B ** i
        q = D // (B * bi)
        y = y.reshape(bs, q, B, bi).swapaxes(2, 3).reshape(bs, nb, B)
        y = np.einsum("bnk,nkj->bnj", y, w[i])
        y = y.reshape(bs, q, bi, B).swapaxes(2, 3).reshape(bs, D)
    if bias is not None:
        y = y + np.asarray(bias, dtype=np.float64)
    return y


if __name__ == "__main__":
    input_dim, block_dim, batch = 64, 8, 16
    nb = input_dim // block_dim

    # num_layers = ceil(log_{block_dim}(input_dim)), integer arithmetic
    num_layers, cap = 0, 1
    while cap < input_dim:
        cap *= block_dim
        num_layers += 1

    key = jax.random.PRNGKey(0)
    k_x, k_w, k_b = jax.random.split(key, 3)
    x = jax.random.normal(k_x, (batch, input_dim), dtype=jnp.float32)
    # kaiming_uniform_(a=sqrt(5)) on a (nb, B, B) tensor: fan_in = B*B -> bound = 1/B
    bound = 1.0 / block_dim
    weights = jax.random.uniform(
        k_w, (num_layers, nb, block_dim, block_dim),
        minval=-bound, maxval=bound, dtype=jnp.float32)
    bias = jax.random.normal(k_b, (1, input_dim), dtype=jnp.float32)

    # bias=False path (module default)
    fwd = jax.jit(functools.partial(block_linear_mixer_forward, block_dim=block_dim))
    out = jax.block_until_ready(fwd(x, weights))
    ref = _reference_forward_np(x, weights, block_dim)
    np.testing.assert_allclose(np.asarray(out), ref, rtol=1e-2, atol=1e-5)

    # bias=True path (fused bias add)
    fwd_b = jax.jit(functools.partial(block_linear_mixer_forward, block_dim=block_dim))
    out_b = jax.block_until_ready(fwd_b(x, weights, bias=bias))
    ref_b = _reference_forward_np(x, weights, block_dim, bias=bias)
    np.testing.assert_allclose(np.asarray(out_b), ref_b, rtol=1e-2, atol=1e-5)

    print("KERNEL_OK")
</pallas_src>

<mosaic_0001>
module attributes {stable_mosaic.version = 11 : i64} {
  func.func @_mixer_matmul_onepass_kernel(%arg0: i32, %arg1: i32, %arg2: memref<8x64xf32, #tpu.memory_space<vmem>>, %arg3: memref<64x64xf32, #tpu.memory_space<vmem>>, %arg4: memref<1x64xf32, #tpu.memory_space<vmem>>, %arg5: memref<8x64xf32, #tpu.memory_space<vmem>>) attributes {dimension_semantics = [#tpu.dimension_semantics<parallel>, #tpu.dimension_semantics<parallel>], iteration_bounds = array<i64: 2, 1>, scalar_prefetch = 0 : i64, scratch_operands = 0 : i64, tpu.core_type = #tpu.core_type<tc>, window_params = [{transform_indices = @transform_0, window_bounds = array<i64: 8, 64>}, {transform_indices = @transform_1, window_bounds = array<i64: 64, 64>}, {transform_indices = @transform_2, window_bounds = array<i64: 1, 64>}, {transform_indices = @transform_3, window_bounds = array<i64: 8, 64>}]} {
    %c0 = arith.constant 0 : index
    %c0_0 = arith.constant 0 : index
    %0 = vector.load %arg2[%c0, %c0_0] : memref<8x64xf32, #tpu.memory_space<vmem>>, vector<8x64xf32>
    %c0_1 = arith.constant 0 : index
    %c0_2 = arith.constant 0 : index
    %1 = vector.load %arg3[%c0_1, %c0_2] : memref<64x64xf32, #tpu.memory_space<vmem>>, vector<64x64xf32>
    %cst = arith.constant dense<0.000000e+00> : vector<8x64xf32>
    %2 = tpu.matmul %0, %1, %cst {dimension_numbers = #tpu.dot_dimension_numbers<[1], [0], [0], [1], [0, 0, 1, 1], [], []>} : vector<8x64xf32>, vector<64x64xf32>, vector<8x64xf32> -> vector<8x64xf32>
    %c0_3 = arith.constant 0 : index
    %c0_4 = arith.constant 0 : index
    %3 = vector.load %arg4[%c0_3, %c0_4] : memref<1x64xf32, #tpu.memory_space<vmem>>, vector<1x64xf32>
    %4 = vector.broadcast %3 : vector<1x64xf32> to vector<8x64xf32>
    %5 = arith.addf %2, %4 : vector<8x64xf32>
    %c0_5 = arith.constant 0 : index
    %c0_6 = arith.constant 0 : index
    %6 = vector.load %arg5[%c0_5, %c0_6] : memref<8x64xf32, #tpu.memory_space<vmem>>, vector<8x64xf32>
    tpu.vector_store %arg5[%c0_5, %c0_6], %5 {strides = array<i32>} : memref<8x64xf32, #tpu.memory_space<vmem>>, vector<8x64xf32>,
    return
  }
  func.func @transform_0(%arg0: i32, %arg1: i32) -> (i32, i32) {
    %c0_i32 = arith.constant 0 : i32
    %c0_i32_0 = arith.constant 0 : i32
    return %arg0, %c0_i32 : i32, i32
  }
  func.func @transform_1(%arg0: i32, %arg1: i32) -> (i32, i32) {
    %c0_i32 = arith.constant 0 : i32
    %c0_i32_0 = arith.constant 0 : i32
    return %c0_i32, %arg1 : i32, i32
  }
  func.func @transform_2(%arg0: i32, %arg1: i32) -> (i32, i32) {
    %c0_i32 = arith.constant 0 : i32
    %c0_i32_0 = arith.constant 0 : i32
    return %c0_i32, %arg1 : i32, i32
  }
  func.func @transform_3(%arg0: i32, %arg1: i32) -> (i32, i32) {
    %c0_i32 = arith.constant 0 : i32
    return %arg0, %arg1 : i32, i32
  }
}

</mosaic_0001>

<llo_original>
// kernel: block_linear_mixer_forward.1
$region0: #{block_linear_mixer_forward.1}
  #allocation0 [shape = 'u32[]', space=smem, size = 0x4, offset = 0x4, fixed_abs, tag = 'smem constant byte address 0x4 - core index']
  #allocation1 [shape = 'u32[144,128]{1,0:T(1,128)}', space=vmem, size = 0x12000, scoped, tag = 'internal scratch']
  %s0 = inlined_call_operand.vmem [shape: f32[16,64], index: 0, kind: input, shape index: {}]
  %s1 = inlined_call_operand.vmem [shape: f32[64,64], index: 1, kind: input, shape index: {}]
  %s2 = inlined_call_operand.vmem [shape: f32[1,64], index: 2, kind: input, shape index: {}]
  %s3 = inlined_call_operand.hbm [shape: f32[16,64], index: 3, kind: output, shape index: {}]
  %s4 = sld [smem:[#allocation0]]
  $region45: #{block_linear_mixer_forward.1} parent=0
    _
  %s6 = ssub.s32 1, %s4
  %s7 = scalar_select 0, %s6, %s4
  $region1: #{block_linear_mixer_forward.1} parent=0
    #allocation2 [shape = 'u8[8192]{0}', space=vmem, size = 0x2000, scoped, tag = 'output window, operand 0']
    #allocation3 [shape = 's32[2]{0}', space=sflag, size = 0x8, scoped, tag = 'scoped memory for block_linear_mixer_forward.1']
    %8 = vsyncpa [#allocation3], 0
    %s9 = scalar_lea.sflag [#allocation3], 1
    %10 = vsyncpa %s9, 0
    loop: start=0, step=1, limit=4
    $region2: #{block_linear_mixer_forward.1} parent=1 // loop_pre_header
      _
    $region3: #{block_linear_mixer_forward.1} parent=1 // loop_header
      %s12 = sphi 0, %s16
      %p13 = scmp.ge.s32.totalorder %s12, 4
      %s19 = sphi 0, %s31
      %s20 = sphi 0, %s27
      %s21 = sphi 0, %s19
      %s22 = sphi 0, %s20
      %s23 = sphi 0, %s21
      %s24 = sphi 0, %s22
      %s34 = sphi 0, %s36
      %s37 = sphi 0, %s34
      %s38 = sphi 0, %s37
      %s54 = sphi 0, %s38
      %s60 = sphi 0, %s62
      %s63 = sphi 0, %s60
      %s64 = sphi 0, %s63
      %s80 = sphi 0, %s64
      %s86 = sphi 0, %s88
      %s89 = sphi 0, %s86
      %s90 = sphi 0, %s89
      %s106 = sphi 0, %s90
      %s114 = sphi 0, %s116
      %s117 = sphi 0, %s114
      %s118 = sphi 0, %s117
      %s134 = sphi 0, %s118
    $region4: #{block_linear_mixer_forward.1} parent=1 // loop_header_branch
      %15 = sbr.rel (%p13) target = $region8
    $region5: #{block_linear_mixer_forward.1} parent=1 // loop_body
      %s17 = ssub.s32 %s12, 1
      %s18 = ssub.s32 %s12, 2
      %s25 = sadd.s32 1, %s20
      %p26 = scmp.ge.s32.totalorder %s25, 1
      %s27 = scalar_select %p26, 0, %s25
      %s28 = sadd.s32 1, %s19
      %s29 = scalar_select %p26, %s28, %s19
      %p30 = scmp.ge.s32.totalorder %s29, 2
      %s31 = scalar_select %p30, 0, %s29
      %s32 = ssub.s32 %s19, %s31
      %p33 = scmp.eq.s32.totalorder %s32, 0
      %s35 = sadd.s32 %s34, 1
      %s36 = scalar_select %p33, %s34, %s35
      %p39 = pneg %p33
      %p40 = scmp.eq.s32.totalorder %s12, 1
      %p41 = por %p39, %p40
      %p42 = scmp.ne.s32.totalorder %s34, %s37
      %p43 = scmp.eq.s32.totalorder %s12, 0
      %p44 = por %p42, %p43
      %p45 = scmp.ne.s32.totalorder %s34, %s37
      %p46 = scmp.eq.s32.totalorder %s17, 1
      %p47 = por %p45, %p46
      %p48 = scmp.ne.s32.totalorder %s37, %s38
      %p49 = scmp.eq.s32.totalorder %s17, 0
      %p50 = por %p48, %p49
      %p51 = scmp.ne.s32.totalorder %s37, %s38
      %p52 = scmp.eq.s32.totalorder %s18, 1
      %p53 = por %p51, %p52
      %p55 = scmp.ne.s32.totalorder %s38, %s54
      %p56 = scmp.eq.s32.totalorder %s18, 0
      %p57 = por %p55, %p56
      %s58 = ssub.s32 %s20, %s27
      %p59 = scmp.eq.s32.totalorder %s58, 0
      %s61 = sadd.s32 %s60, 1
      %s62 = scalar_select %p59, %s60, %s61
      %p65 = pneg %p59
      %p66 = scmp.eq.s32.totalorder %s12, 1
      %p67 = por %p65, %p66
      %p68 = scmp.ne.s32.totalorder %s60, %s63
      %p69 = scmp.eq.s32.totalorder %s12, 0
      %p70 = por %p68, %p69
      %p71 = scmp.ne.s32.totalorder %s60, %s63
      %p72 = scmp.eq.s32.totalorder %s17, 1
      %p73 = por %p71, %p72
      %p74 = scmp.ne.s32.totalorder %s63, %s64
      %p75 = scmp.eq.s32.totalorder %s17, 0
      %p76 = por %p74, %p75
      %p77 = scmp.ne.s32.totalorder %s63, %s64
      %p78 = scmp.eq.s32.totalorder %s18, 1
      %p79 = por %p77, %p78
      %p81 = scmp.ne.s32.totalorder %s64, %s80
      %p82 = scmp.eq.s32.totalorder %s18, 0
      %p83 = por %p81, %p82
      %s84 = ssub.s32 %s20, %s27
      %p85 = scmp.eq.s32.totalorder %s84, 0
      %s87 = sadd.s32 %s86, 1
      %s88 = scalar_select %p85, %s86, %s87
      %p91 = pneg %p85
      %p92 = scmp.eq.s32.totalorder %s12, 1
      %p93 = por %p91, %p92
      %p94 = scmp.ne.s32.totalorder %s86, %s89
      %p95 = scmp.eq.s32.totalorder %s12, 0
      %p96 = por %p94, %p95
      %p97 = scmp.ne.s32.totalorder %s86, %s89
      %p98 = scmp.eq.s32.totalorder %s17, 1
      %p99 = por %p97, %p98
      %p100 = scmp.ne.s32.totalorder %s89, %s90
      %p101 = scmp.eq.s32.totalorder %s17, 0
      %p102 = por %p100, %p101
      %p103 = scmp.ne.s32.totalorder %s89, %s90
      %p104 = scmp.eq.s32.totalorder %s18, 1
      %p105 = por %p103, %p104
      %p107 = scmp.ne.s32.totalorder %s90, %s106
      %p108 = scmp.eq.s32.totalorder %s18, 0
      %p109 = por %p107, %p108
      %s110 = ssub.s32 %s19, %s31
      %s111 = ssub.s32 %s20, %s27
      %s112 = sor.u32 %s110, %s111
      %p113 = scmp.eq.s32.totalorder %s112, 0
      %s115 = sadd.s32 %s114, 1
      %s116 = scalar_select %p113, %s114, %s115
      %p119 = pneg %p113
      %p120 = scmp.eq.s32.totalorder %s12, 1
      %p121 = por %p119, %p120
      %p122 = scmp.ne.s32.totalorder %s114, %s117
      %p123 = scmp.eq.s32.totalorder %s12, 0
      %p124 = por %p122, %p123
      %p125 = scmp.ne.s32.totalorder %s114, %s117
      %p126 = scmp.eq.s32.totalorder %s17, 1
      %p127 = por %p125, %p126
      %p128 = scmp.ne.s32.totalorder %s117, %s118
      %p129 = scmp.eq.s32.totalorder %s17, 0
      %p130 = por %p128, %p129
      %p131 = scmp.ne.s32.totalorder %s117, %s118
      %p132 = scmp.eq.s32.totalorder %s18, 1
      %p133 = por %p131, %p132
      %p135 = scmp.ne.s32.totalorder %s118, %s134
      %p136 = scmp.eq.s32.totalorder %s18, 0
      %p137 = por %p135, %p136
      %p138 = scmp.le.s32.totalorder 1, %s12
      %p139 = scmp.lt.s32.totalorder %s12, 3
      %p140 = pnand %p138, %p139
      %p141 = pneg %p140
      // Predicated region
      $region9: #{block_linear_mixer_forward.1} parent=5 // pred_check
        _
      $region10: #{block_linear_mixer_forward.1} parent=5 // pred_check_branch
        %143 = sbr.rel (%p140) target = $region12
      $region11: #{block_linear_mixer_forward.1} parent=5 // pred_region
        %s144 = ssub.s32 %s12, 1
        // Predicated region
        $region13: #{block_linear_mixer_forward.1} parent=11 // pred_check
          %p145 = pneg %p76
        $region14: #{block_linear_mixer_forward.1} parent=11 // pred_check_branch
          %147 = sbr.rel (%p145) target = $region16
        $region15: #{block_linear_mixer_forward.1} parent=11 // pred_region
          %p148 = scmp.lt.s32.totalorder %s22, 0
          %s149 = scalar_select %p148, %s22, 0
          %s150 = smul.addr %s149, 8
          %s151 = scalar_lea.vmem %s1, %s150
        $region16: #{block_linear_mixer_forward.1} parent=11 // pred_fallthru
          _
        // Predicated region
        $region17: #{block_linear_mixer_forward.1} parent=11 // pred_check
          %p152 = pneg %p102
        $region18: #{block_linear_mixer_forward.1} parent=11 // pred_check_branch
          %154 = sbr.rel (%p152) target = $region20
        $region19: #{block_linear_mixer_forward.1} parent=11 // pred_region
          %p155 = scmp.lt.s32.totalorder %s22, 0
          %s156 = scalar_select %p155, %s22, 0
          %s157 = scalar_lea.vmem %s2, %s156
        $region20: #{block_linear_mixer_forward.1} parent=11 // pred_fallthru
          _
      $region12: #{block_linear_mixer_forward.1} parent=5 // pred_fallthru
        _
      %p158 = scmp.lt.s32.totalorder %s12, 2
      // Predicated region
      $region21: #{block_linear_mixer_forward.1} parent=5 // pred_check
        %p159 = pneg %p158
      $region22: #{block_linear_mixer_forward.1} parent=5 // pred_check_branch
        %161 = sbr.rel (%p159) target = $region24
      $region23: #{block_linear_mixer_forward.1} parent=5 // pred_region
        // Predicated region
        $region25: #{block_linear_mixer_forward.1} parent=23 // pred_check
          %p162 = pneg %p44
        $region26: #{block_linear_mixer_forward.1} parent=23 // pred_check_branch
          %164 = sbr.rel (%p162) target = $region28
        $region27: #{block_linear_mixer_forward.1} parent=23 // pred_region
          %p165 = scmp.lt.s32.totalorder %s19, 1
          %s166 = scalar_select %p165, %s19, 1
          %s167 = smul.addr %s166, 8
          %s168 = scalar_lea.vmem %s0, %s167
        $region28: #{block_linear_mixer_forward.1} parent=23 // pred_fallthru
          _
      $region24: #{block_linear_mixer_forward.1} parent=5 // pred_fallthru
        _
      %p169 = scmp.le.s32.totalorder 1, %s12
      %p170 = scmp.lt.s32.totalorder %s12, 3
      %p171 = pnand %p169, %p170
      %p172 = pneg %p171
      // Predicated region
      $region29: #{block_linear_mixer_forward.1} parent=5 // pred_check
        _
      $region30: #{block_linear_mixer_forward.1} parent=5 // pred_check_branch
        %174 = sbr.rel (%p171) target = $region32
      $region31: #{block_linear_mixer_forward.1} parent=5 // pred_region
        %s175 = ssub.s32 %s12, 1
        %p176 = scmp.lt.s32.totalorder %s21, 1
        %s177 = scalar_select %p176, %s21, 1
        %s178 = smul.addr %s177, 8
        %s179 = scalar_lea.vmem %s0, %s178
        %p180 = pneg %p50
        %p181 = pneg %p47
        %p182 = scmp.lt.s32.totalorder %s22, 0
        %s183 = scalar_select %p182, %s22, 0
        %s184 = smul.addr %s183, 8
        %s185 = scalar_lea.vmem %s1, %s184
        %p186 = pneg %p76
        %p187 = pneg %p73
        %p188 = scmp.lt.s32.totalorder %s22, 0
        %s189 = scalar_select %p188, %s22, 0
        %s190 = scalar_lea.vmem %s2, %s189
        %p191 = pneg %p102
        %p192 = pneg %p99
        %p193 = pneg %p130
        %p194 = pneg %p127
        %s195 = sand.u32 %s117, 1
        %s196 = scalar_lea.sflag [#allocation3], %s195
        %s197 = sand.u32 %s117, 1
        %s198 = smul.addr %s197, 8
        %s199 = scalar_lea.vmem [#allocation2], %s198
        %p200 = scmp.lt.s32.totalorder %s21, 1
        %s201 = scalar_select %p200, %s21, 1
        %s202 = smul.addr %s201, 8
        %s203 = scalar_lea.vmem %s0, %s202
        %p204 = scmp.lt.s32.totalorder %s22, 0
        %s205 = scalar_select %p204, %s22, 0
        %s206 = smul.addr %s205, 8
        %s207 = scalar_lea.vmem %s1, %s206
        %p208 = scmp.lt.s32.totalorder %s22, 0
        %s209 = scalar_select %p208, %s22, 0
        %s210 = scalar_lea.vmem %s2, %s209
        %v211 = vld [vmem:[%s203] sm:$0xff]
        %v212 = vld [vmem:[%s207] sm:$0xff]
        %v213 = vld [vmem:[%s207 + $0x8] sm:$0xff]
        %v214 = vld [vmem:[%s207 + $0x10] sm:$0xff]
        %v215 = vld [vmem:[%s207 + $0x18] sm:$0xff]
        %v216 = vld [vmem:[%s207 + $0x20] sm:$0xff]
        %v217 = vld [vmem:[%s207 + $0x28] sm:$0xff]
        %v218 = vld [vmem:[%s207 + $0x30] sm:$0xff]
        %v219 = vld [vmem:[%s207 + $0x38] sm:$0xff]
        %v220 = vld [vmem:[%s210] sm:$0x1]
        %v222 = vlaneseq
        %v223 = vshrl.u32 %v222, 7
        %v224 = vsub.s32 0, %v223
        %v225 = vrot.slane %v220, %v224
        %vm227 = vcmask 523264
        %v229 = vsel %vm227, %v211, 0
        %231 = vmatprep.subr.mxu0 0.0
        %232 = vmatpush1.msra.mxu0 %v212
        %233 = vmatprep.subr.mxu0 0.0
        %234 = vmatpush1.msra.mxu0 %v213
        %235 = vmatprep.subr.mxu0 0.0
        %236 = vmatpush1.msra.mxu0 %v214
        %237 = vmatprep.subr.mxu0 0.0
        %238 = vmatpush1.msra.mxu0 %v215
        %239 = vmatprep.subr.mxu0 0.0
        %240 = vmatpush1.msra.mxu0 %v216
        %241 = vmatprep.subr.mxu0 0.0
        %242 = vmatpush1.msra.mxu0 %v217
        %243 = vmatprep.subr.mxu0 0.0
        %244 = vmatpush1.msra.mxu0 %v218
        %245 = vmatprep.subr.mxu0 0.0
        %246 = vmatpush1.msra.mxu0 %v219
        %247 = vmatprep.subr.mxu0 0.0
        %248 = vmatpush1.msra.mxu0 0.0
        %249 = vmatprep.subr.mxu0 0.0
        %250 = vmatpush1.msra.mxu0 0.0
        %251 = vmatprep.subr.mxu0 0.0
        %252 = vmatpush1.msra.mxu0 0.0
        %253 = vmatprep.subr.mxu0 0.0
        %254 = vmatpush1.msra.mxu0 0.0
        %255 = vmatprep.subr.mxu0 0.0
        %256 = vmatpush1.msra.mxu0 0.0
        %257 = vmatprep.subr.mxu0 0.0
        %258 = vmatpush1.msra.mxu0 0.0
        %259 = vmatprep.subr.mxu0 0.0
        %260 = vmatpush1.msra.mxu0 0.0
        %261 = vmatprep.subr.mxu0 0.0
        %262 = vmatpush1.msra.mxu0 0.0
        %263 = vmatprep.subr.mxu0 0.0
        %264 = vmatpush1.msra.mxu0 0.0
        %265 = vmatprep.subr.mxu0 0.0
        %266 = vmatpush1.msra.mxu0 0.0
        %267 = vmatprep.subr.mxu0 0.0
        %268 = vmatpush1.msra.mxu0 0.0
        %269 = vmatprep.subr.mxu0 0.0
        %270 = vmatpush1.msra.mxu0 0.0
        %271 = vmatprep.subr.mxu0 0.0
        %272 = vmatpush1.msra.mxu0 0.0
        %273 = vmatprep.subr.mxu0 0.0
        %274 = vmatpush1.msra.mxu0 0.0
        %275 = vmatprep.subr.mxu0 0.0
        %276 = vmatpush1.msra.mxu0 0.0
        %277 = vmatprep.subr.mxu0 0.0
        %278 = vmatpush1.msra.mxu0 0.0
        %279 = vmatprep.subr.mxu0 0.0
        %280 = vmatpush1.msra.mxu0 0.0
        %281 = vmatprep.subr.mxu0 0.0
        %282 = vmatpush1.msra.mxu0 0.0
        %283 = vmatprep.subr.mxu0 0.0
        %284 = vmatpush1.msra.mxu0 0.0
        %285 = vmatprep.subr.mxu0 0.0
        %286 = vmatpush1.msra.mxu0 0.0
        %287 = vmatprep.subr.mxu0 0.0
        %288 = vmatpush1.msra.mxu0 0.0
        %289 = vmatprep.subr.mxu0 0.0
        %290 = vmatpush1.msra.mxu0 0.0
        %291 = vmatprep.subr.mxu0 0.0
        %292 = vmatpush1.msra.mxu0 0.0
        %293 = vmatprep.subr.mxu0 0.0
        %294 = vmatpush1.msra.mxu0 0.0
        %295 = vmatprep.mubr.f32.mxu0 0.0
        %296 = vmatmul.mubr.f32.gmra.mrb[0].mxu0 %v229
        %v297 = vpop.f32.mrb[0].mxu0
        %v298 = vadd.f32 %v225, %v297
        %v299 = vpop.f32.mrb[0].mxu0
        %300 = vdwg.mxu0
        %301 = vst.msk [vmem:[%s199] sm:$0xff] %vm227, %v298
        %s302 = sand.u32 %s117, 1
        %s303 = scalar_lea.sflag [#allocation3], %s302
        %s304 = sand.u32 %s117, 1
        %s305 = smul.addr %s304, 8
        %s306 = scalar_lea.vmem [#allocation2], %s305
        // Predicated region
        $region33: #{block_linear_mixer_forward.1} parent=31 // pred_check
          %p307 = pneg %p127
        $region34: #{block_linear_mixer_forward.1} parent=31 // pred_check_branch
          %309 = sbr.rel (%p307) target = $region36
        $region35: #{block_linear_mixer_forward.1} parent=31 // pred_region
          %s311 = ssub.s32 128, 128
          %312 = vsyncadd %s303, %s311
          %s313 = sadd.s32 %s22, %s21
          %s314 = smul.addr %s313, 128
          %s315 = scalar_lea.hbm %s3, %s314
          %s317 = sshll.u32 %s306, 4
          %s318 = int_to_ptr.vmem [resolvable:$true] %s317
          %320 = dma.vmem_to_hbm [thread:$0]  %s318, 128, %s315, %s303
        $region36: #{block_linear_mixer_forward.1} parent=31 // pred_fallthru
          _
      $region32: #{block_linear_mixer_forward.1} parent=5 // pred_fallthru
        _
      %p321 = scmp.le.s32.totalorder 2, %s12
      // Predicated region
      $region37: #{block_linear_mixer_forward.1} parent=5 // pred_check
        %p322 = pneg %p321
      $region38: #{block_linear_mixer_forward.1} parent=5 // pred_check_branch
        %324 = sbr.rel (%p322) target = $region40
      $region39: #{block_linear_mixer_forward.1} parent=5 // pred_region
        %s325 = ssub.s32 %s12, 2
        // Predicated region
        $region41: #{block_linear_mixer_forward.1} parent=39 // pred_check
          %p326 = pneg %p133
        $region42: #{block_linear_mixer_forward.1} parent=39 // pred_check_branch
          %328 = sbr.rel (%p326) target = $region44
        $region43: #{block_linear_mixer_forward.1} parent=39 // pred_region
          %s329 = sand.u32 %s118, 1
          %s330 = scalar_lea.sflag [#allocation3], %s329
          %s331 = sand.u32 %s118, 1
          %s332 = smul.addr %s331, 8
          %s333 = scalar_lea.vmem [#allocation2], %s332
          %334 = dma.done %s330, 128
        $region44: #{block_linear_mixer_forward.1} parent=39 // pred_fallthru
          _
      $region40: #{block_linear_mixer_forward.1} parent=5 // pred_fallthru
        _
    $region6: #{block_linear_mixer_forward.1} parent=1 // loop_footer
      %s16 = sadd.s32 1, %s12
    $region7: #{block_linear_mixer_forward.1} parent=1 // loop_footer_branch
      %11 = sbr.rel target = $region3
    $region8: #{block_linear_mixer_forward.1} parent=1 // loop_exit
      _
    %335 = vsyncpa [#allocation3], 1
    %s336 = scalar_lea.sflag [#allocation3], 1
    %337 = vsyncpa %s336, 1

</llo_original>
